<compile_context>
chip_gen: v7x
topology: tpu7x:2x2x1
jax: 0.10.0
libtpu: 0.0.40
codegen_flags: <defaults>
</compile_context>

<pallas_src>
import functools

import jax
import jax.numpy as jnp
from jax.experimental import pallas as pl
from jax.experimental.pallas import tpu as pltpu

D_IN = 192
D_H1 = 512
D_H2 = 256
D_H3 = 256
D_FEAT = 192
EPS = 1e-5

TILE_B_MAX = 512  # batch tile (multiple of 8); ~2 MiB of f32 activations/step


def _round_up(n, m):
    return ((n + m - 1) // m) * m


def _instance_norm_relu(h):
    # InstanceNorm1d on (B, F): per-row normalization, biased variance,
    # eps=1e-5, no affine; followed by ReLU.
    # One-pass moments: var = E[h^2] - mean^2 (clamped at 0) -> the two
    # lane-axis reductions are independent (better XLU overlap).
    inv_n = 1.0 / h.shape[-1]
    mu = jnp.sum(h, axis=-1, keepdims=True) * inv_n
    ms = jnp.sum(h * h, axis=-1, keepdims=True) * inv_n
    var = jnp.maximum(ms - mu * mu, 0.0)
    return jnp.maximum((h - mu) * jax.lax.rsqrt(var + EPS), 0.0)


def _mlp_kernel(x_ref, w1_ref, w11_ref, w12_ref, wt_ref, y_ref, *, matmul_dtype):
    f32 = jnp.float32

    # fc1: 192 -> 512 (no bias), instance-norm + relu
    h = jnp.dot(
        x_ref[...].astype(matmul_dtype), w1_ref[...], preferred_element_type=f32
    )
    h = _instance_norm_relu(h)

    # fc1_1: 512 -> 256, instance-norm + relu
    h = jnp.dot(h.astype(matmul_dtype), w11_ref[...], preferred_element_type=f32)
    h = _instance_norm_relu(h)

    # fc1_2: 256 -> 256, instance-norm + relu
    h = jnp.dot(h.astype(matmul_dtype), w12_ref[...], preferred_element_type=f32)
    h = _instance_norm_relu(h)

    # folded tail: reducedim @ fc2 (256 -> num_classes, zero-padded to 128 lanes)
    y_ref[...] = jnp.dot(
        h.astype(matmul_dtype), wt_ref[...], preferred_element_type=f32
    ).astype(y_ref.dtype)


@functools.partial(jax.jit, static_argnames=("num_classes", "matmul_dtype"))
def classifier_spk_eresnet_abn_forward(
    x, params, *, num_classes, matmul_dtype=jnp.bfloat16
):
    """x: (B, 192) (or (192,)); params: dict of transposed linear weights (in, out)."""
    if x.ndim < 2:
        x = x[None]
    x = x.reshape(x.shape[0], -1)  # torch.flatten(x, 1)
    B = x.shape[0]

    # Fold reducedim @ fc2 (no nonlinearity between them) and pad the output
    # lane dim up to a multiple of 128 for dense, unmasked stores.
    c_pad = _round_up(num_classes, 128)
    w_tail = jnp.dot(
        params["reducedim"], params["fc2"], preferred_element_type=jnp.float32
    )
    w_tail = jnp.pad(w_tail, ((0, 0), (0, c_pad - num_classes)))

    # Batch tiling: pad B to a multiple of the tile (and of 8). Padded zero
    # rows normalize to zeros (no NaNs) and are sliced off below.
    tile_b = min(TILE_B_MAX, _round_up(B, 8))
    b_pad = _round_up(B, tile_b)
    if b_pad != B:
        x = jnp.pad(x, ((0, b_pad - B), (0, 0)))
    grid_b = b_pad // tile_b

    w1 = params["fc1"].astype(matmul_dtype)
    w11 = params["fc1_1"].astype(matmul_dtype)
    w12 = params["fc1_2"].astype(matmul_dtype)
    w_tail = w_tail.astype(matmul_dtype)

    # Weights: full blocks with a constant index_map -> VMEM-resident.
    w_spec = lambda shape: pl.BlockSpec(shape, lambda b: (0, 0))

    out = pl.pallas_call(
        functools.partial(_mlp_kernel, matmul_dtype=matmul_dtype),
        out_shape=jax.ShapeDtypeStruct((b_pad, c_pad), jnp.float32),
        grid_spec=pltpu.PrefetchScalarGridSpec(
            num_scalar_prefetch=0,
            grid=(grid_b,),
            in_specs=[
                pl.BlockSpec((tile_b, D_IN), lambda b: (b, 0)),
                w_spec((D_IN, D_H1)),
                w_spec((D_H1, D_H2)),
                w_spec((D_H2, D_H3)),
                w_spec((D_H3, c_pad)),
            ],
            out_specs=pl.BlockSpec((tile_b, c_pad), lambda b: (b, 0)),
        ),
        compiler_params=pltpu.CompilerParams(
            # Batch rows are independent: shard the grid across TensorCores
            # on v7x (neutral on single-TC v5e/v6e).
            dimension_semantics=("parallel",),
            # Leave headroom on v7x (64 MiB physical VMEM per TC).
            vmem_limit_bytes=32 << 20,
        ),
    )(x, w1, w11, w12, w_tail)

    return out[:B, :num_classes]


def init_params(key, num_classes):
    """Deterministic synthetic weights. Stored transposed: (in_features, out_features)."""

    def linear_w(k, fan_in, fan_out):
        # kaiming-uniform-ish bound like torch.nn.Linear default
        bound = 1.0 / jnp.sqrt(jnp.float32(fan_in))
        return jax.random.uniform(
            k, (fan_in, fan_out), jnp.float32, minval=-bound, maxval=bound
        )

    k1, k2, k3, k4, k5 = jax.random.split(key, 5)
    return {
        "fc1": linear_w(k1, D_IN, D_H1),
        "fc1_1": linear_w(k2, D_H1, D_H2),
        "fc1_2": linear_w(k3, D_H2, D_H3),
        "reducedim": linear_w(k4, D_H3, D_FEAT),
        "fc2": linear_w(k5, D_FEAT, num_classes),
    }


def _reference_forward(x, params):
    """Pure-JAX f32 reference mirroring the torch module (two-pass norm, unfused tail)."""
    if x.ndim < 2:
        x = x[None]
    x = x.reshape(x.shape[0], -1)

    def norm(h):
        mu = jnp.mean(h, axis=-1, keepdims=True)
        var = jnp.mean((h - mu) * (h - mu), axis=-1, keepdims=True)
        return (h - mu) / jnp.sqrt(var + EPS)

    h = jnp.maximum(norm(x @ params["fc1"]), 0.0)
    h = jnp.maximum(norm(h @ params["fc1_1"]), 0.0)
    h = jnp.maximum(norm(h @ params["fc1_2"]), 0.0)
    feat = h @ params["reducedim"]
    return feat @ params["fc2"]


if __name__ == "__main__":
    num_classes = 10
    batch = 2

    key = jax.random.PRNGKey(0)
    k_x, k_p = jax.random.split(key)
    x = jax.random.normal(k_x, (batch, D_IN), jnp.float32)
    params = init_params(k_p, num_classes)

    y_ref = _reference_forward(x, params)

    # f32 MXU path: tight check against the reference semantics.
    y_f32 = classifier_spk_eresnet_abn_forward(
        x, params, num_classes=num_classes, matmul_dtype=jnp.float32
    )
    y_f32 = jax.block_until_ready(y_f32)
    assert y_f32.shape == (batch, num_classes)
    assert jnp.allclose(y_f32, y_ref, atol=1e-4, rtol=1e-4)

    # bf16-operand MXU path (default fast path on v6e/v7x): small rounding only.
    y_bf16 = classifier_spk_eresnet_abn_forward(x, params, num_classes=num_classes)
    y_bf16 = jax.block_until_ready(y_bf16)
    assert y_bf16.shape == (batch, num_classes)
    assert jnp.allclose(y_bf16, y_ref, atol=5e-2, rtol=5e-2)

    print("KERNEL_OK")
</pallas_src>

<mosaic_0001>
module attributes {stable_mosaic.version = 11 : i64} {
  func.func @_mlp_kernel(%arg0: i32, %arg1: memref<8x192xf32, #tpu.memory_space<vmem>>, %arg2: memref<192x512xf32, #tpu.memory_space<vmem>>, %arg3: memref<512x256xf32, #tpu.memory_space<vmem>>, %arg4: memref<256x256xf32, #tpu.memory_space<vmem>>, %arg5: memref<256x128xf32, #tpu.memory_space<vmem>>, %arg6: memref<8x128xf32, #tpu.memory_space<vmem>>) attributes {dimension_semantics = [#tpu.dimension_semantics<parallel>], iteration_bounds = array<i64: 1>, scalar_prefetch = 0 : i64, scratch_operands = 0 : i64, tpu.core_type = #tpu.core_type<tc>, window_params = [{transform_indices = @transform_0, window_bounds = array<i64: 8, 192>}, {pipeline_mode = #tpu.pipeline_mode<synchronous>, transform_indices = @transform_1, window_bounds = array<i64: 192, 512>}, {pipeline_mode = #tpu.pipeline_mode<synchronous>, transform_indices = @transform_2, window_bounds = array<i64: 512, 256>}, {pipeline_mode = #tpu.pipeline_mode<synchronous>, transform_indices = @transform_3, window_bounds = array<i64: 256, 256>}, {pipeline_mode = #tpu.pipeline_mode<synchronous>, transform_indices = @transform_4, window_bounds = array<i64: 256, 128>}, {transform_indices = @transform_5, window_bounds = array<i64: 8, 128>}]} {
    %c0 = arith.constant 0 : index
    %c0_0 = arith.constant 0 : index
    %0 = vector.load %arg1[%c0, %c0_0] : memref<8x192xf32, #tpu.memory_space<vmem>>, vector<8x192xf32>
    %c0_1 = arith.constant 0 : index
    %c0_2 = arith.constant 0 : index
    %1 = vector.load %arg2[%c0_1, %c0_2] : memref<192x512xf32, #tpu.memory_space<vmem>>, vector<192x512xf32>
    %cst = arith.constant dense<0.000000e+00> : vector<8x512xf32>
    %2 = tpu.matmul %0, %1, %cst {dimension_numbers = #tpu.dot_dimension_numbers<[1], [0], [0], [1], [0, 0, 1, 1], [], []>} : vector<8x192xf32>, vector<192x512xf32>, vector<8x512xf32> -> vector<8x512xf32>
    %cst_3 = arith.constant dense<0.000000e+00> : vector<8xf32>
    %3 = vector.multi_reduction <add>, %2, %cst_3 [1] : vector<8x512xf32> to vector<8xf32>
    %4 = vector.shape_cast %3 : vector<8xf32> to vector<8x1xf32>
    %cst_4 = arith.constant 0.001953125 : f32
    %5 = vector.broadcast %cst_4 : f32 to vector<8x1xf32>
    %6 = arith.mulf %4, %5 : vector<8x1xf32>
    %7 = arith.mulf %2, %2 : vector<8x512xf32>
    %cst_5 = arith.constant dense<0.000000e+00> : vector<8xf32>
    %8 = vector.multi_reduction <add>, %7, %cst_5 [1] : vector<8x512xf32> to vector<8xf32>
    %9 = vector.shape_cast %8 : vector<8xf32> to vector<8x1xf32>
    %cst_6 = arith.constant 0.001953125 : f32
    %10 = vector.broadcast %cst_6 : f32 to vector<8x1xf32>
    %11 = arith.mulf %9, %10 : vector<8x1xf32>
    %12 = arith.mulf %6, %6 : vector<8x1xf32>
    %13 = arith.subf %11, %12 : vector<8x1xf32>
    %cst_7 = arith.constant 0.000000e+00 : f32
    %14 = vector.broadcast %cst_7 : f32 to vector<8x1xf32>
    %15 = arith.maximumf %13, %14 : vector<8x1xf32>
    %16 = vector.broadcast %6 : vector<8x1xf32> to vector<8x512xf32>
    %17 = arith.subf %2, %16 : vector<8x512xf32>
    %cst_8 = arith.constant 9.99999974E-6 : f32
    %18 = vector.broadcast %cst_8 : f32 to vector<8x1xf32>
    %19 = arith.addf %15, %18 : vector<8x1xf32>
    %20 = math.rsqrt %19 : vector<8x1xf32>
    %21 = vector.broadcast %20 : vector<8x1xf32> to vector<8x512xf32>
    %22 = arith.mulf %17, %21 : vector<8x512xf32>
    %cst_9 = arith.constant 0.000000e+00 : f32
    %23 = vector.broadcast %cst_9 : f32 to vector<8x512xf32>
    %24 = arith.maximumf %22, %23 : vector<8x512xf32>
    %c0_10 = arith.constant 0 : index
    %c0_11 = arith.constant 0 : index
    %25 = vector.load %arg3[%c0_10, %c0_11] : memref<512x256xf32, #tpu.memory_space<vmem>>, vector<512x256xf32>
    %cst_12 = arith.constant dense<0.000000e+00> : vector<8x256xf32>
    %26 = tpu.matmul %24, %25, %cst_12 {dimension_numbers = #tpu.dot_dimension_numbers<[1], [0], [0], [1], [0, 0, 1, 1], [], []>} : vector<8x512xf32>, vector<512x256xf32>, vector<8x256xf32> -> vector<8x256xf32>
    %cst_13 = arith.constant dense<0.000000e+00> : vector<8xf32>
    %27 = vector.multi_reduction <add>, %26, %cst_13 [1] : vector<8x256xf32> to vector<8xf32>
    %28 = vector.shape_cast %27 : vector<8xf32> to vector<8x1xf32>
    %cst_14 = arith.constant 3.906250e-03 : f32
    %29 = vector.broadcast %cst_14 : f32 to vector<8x1xf32>
    %30 = arith.mulf %28, %29 : vector<8x1xf32>
    %31 = arith.mulf %26, %26 : vector<8x256xf32>
    %cst_15 = arith.constant dense<0.000000e+00> : vector<8xf32>
    %32 = vector.multi_reduction <add>, %31, %cst_15 [1] : vector<8x256xf32> to vector<8xf32>
    %33 = vector.shape_cast %32 : vector<8xf32> to vector<8x1xf32>
    %cst_16 = arith.constant 3.906250e-03 : f32
    %34 = vector.broadcast %cst_16 : f32 to vector<8x1xf32>
    %35 = arith.mulf %33, %34 : vector<8x1xf32>
    %36 = arith.mulf %30, %30 : vector<8x1xf32>
    %37 = arith.subf %35, %36 : vector<8x1xf32>
    %cst_17 = arith.constant 0.000000e+00 : f32
    %38 = vector.broadcast %cst_17 : f32 to vector<8x1xf32>
    %39 = arith.maximumf %37, %38 : vector<8x1xf32>
    %40 = vector.broadcast %30 : vector<8x1xf32> to vector<8x256xf32>
    %41 = arith.subf %26, %40 : vector<8x256xf32>
    %cst_18 = arith.constant 9.99999974E-6 : f32
    %42 = vector.broadcast %cst_18 : f32 to vector<8x1xf32>
    %43 = arith.addf %39, %42 : vector<8x1xf32>
    %44 = math.rsqrt %43 : vector<8x1xf32>
    %45 = vector.broadcast %44 : vector<8x1xf32> to vector<8x256xf32>
    %46 = arith.mulf %41, %45 : vector<8x256xf32>
    %cst_19 = arith.constant 0.000000e+00 : f32
    %47 = vector.broadcast %cst_19 : f32 to vector<8x256xf32>
    %48 = arith.maximumf %46, %47 : vector<8x256xf32>
    %c0_20 = arith.constant 0 : index
    %c0_21 = arith.constant 0 : index
    %49 = vector.load %arg4[%c0_20, %c0_21] : memref<256x256xf32, #tpu.memory_space<vmem>>, vector<256x256xf32>
    %cst_22 = arith.constant dense<0.000000e+00> : vector<8x256xf32>
    %50 = tpu.matmul %48, %49, %cst_22 {dimension_numbers = #tpu.dot_dimension_numbers<[1], [0], [0], [1], [0, 0, 1, 1], [], []>} : vector<8x256xf32>, vector<256x256xf32>, vector<8x256xf32> -> vector<8x256xf32>
    %cst_23 = arith.constant dense<0.000000e+00> : vector<8xf32>
    %51 = vector.multi_reduction <add>, %50, %cst_23 [1] : vector<8x256xf32> to vector<8xf32>
    %52 = vector.shape_cast %51 : vector<8xf32> to vector<8x1xf32>
    %cst_24 = arith.constant 3.906250e-03 : f32
    %53 = vector.broadcast %cst_24 : f32 to vector<8x1xf32>
    %54 = arith.mulf %52, %53 : vector<8x1xf32>
    %55 = arith.mulf %50, %50 : vector<8x256xf32>
    %cst_25 = arith.constant dense<0.000000e+00> : vector<8xf32>
    %56 = vector.multi_reduction <add>, %55, %cst_25 [1] : vector<8x256xf32> to vector<8xf32>
    %57 = vector.shape_cast %56 : vector<8xf32> to vector<8x1xf32>
    %cst_26 = arith.constant 3.906250e-03 : f32
    %58 = vector.broadcast %cst_26 : f32 to vector<8x1xf32>
    %59 = arith.mulf %57, %58 : vector<8x1xf32>
    %60 = arith.mulf %54, %54 : vector<8x1xf32>
    %61 = arith.subf %59, %60 : vector<8x1xf32>
    %cst_27 = arith.constant 0.000000e+00 : f32
    %62 = vector.broadcast %cst_27 : f32 to vector<8x1xf32>
    %63 = arith.maximumf %61, %62 : vector<8x1xf32>
    %64 = vector.broadcast %54 : vector<8x1xf32> to vector<8x256xf32>
    %65 = arith.subf %50, %64 : vector<8x256xf32>
    %cst_28 = arith.constant 9.99999974E-6 : f32
    %66 = vector.broadcast %cst_28 : f32 to vector<8x1xf32>
    %67 = arith.addf %63, %66 : vector<8x1xf32>
    %68 = math.rsqrt %67 : vector<8x1xf32>
    %69 = vector.broadcast %68 : vector<8x1xf32> to vector<8x256xf32>
    %70 = arith.mulf %65, %69 : vector<8x256xf32>
    %cst_29 = arith.constant 0.000000e+00 : f32
    %71 = vector.broadcast %cst_29 : f32 to vector<8x256xf32>
    %72 = arith.maximumf %70, %71 : vector<8x256xf32>
    %c0_30 = arith.constant 0 : index
    %c0_31 = arith.constant 0 : index
    %73 = vector.load %arg5[%c0_30, %c0_31] : memref<256x128xf32, #tpu.memory_space<vmem>>, vector<256x128xf32>
    %cst_32 = arith.constant dense<0.000000e+00> : vector<8x128xf32>
    %74 = tpu.matmul %72, %73, %cst_32 {dimension_numbers = #tpu.dot_dimension_numbers<[1], [0], [0], [1], [0, 0, 1, 1], [], []>} : vector<8x256xf32>, vector<256x128xf32>, vector<8x128xf32> -> vector<8x128xf32>
    %c0_33 = arith.constant 0 : index
    %c0_34 = arith.constant 0 : index
    %75 = vector.load %arg6[%c0_33, %c0_34] : memref<8x128xf32, #tpu.memory_space<vmem>>, vector<8x128xf32>
    tpu.vector_store %arg6[%c0_33, %c0_34], %74 {strides = array<i32>} : memref<8x128xf32, #tpu.memory_space<vmem>>, vector<8x128xf32>,
    return
  }
  func.func @transform_0(%arg0: i32) -> (i32, i32) {
    %c0_i32 = arith.constant 0 : i32
    %c0_i32_0 = arith.constant 0 : i32
    return %arg0, %c0_i32 : i32, i32
  }
  func.func @transform_1(%arg0: i32) -> (i32, i32) {
    %c0_i32 = arith.constant 0 : i32
    %c0_i32_0 = arith.constant 0 : i32
    %c0_i32_1 = arith.constant 0 : i32
    return %c0_i32, %c0_i32_0 : i32, i32
  }
  func.func @transform_2(%arg0: i32) -> (i32, i32) {
    %c0_i32 = arith.constant 0 : i32
    %c0_i32_0 = arith.constant 0 : i32
    %c0_i32_1 = arith.constant 0 : i32
    return %c0_i32, %c0_i32_0 : i32, i32
  }
  func.func @transform_3(%arg0: i32) -> (i32, i32) {
    %c0_i32 = arith.constant 0 : i32
    %c0_i32_0 = arith.constant 0 : i32
    %c0_i32_1 = arith.constant 0 : i32
    return %c0_i32, %c0_i32_0 : i32, i32
  }
  func.func @transform_4(%arg0: i32) -> (i32, i32) {
    %c0_i32 = arith.constant 0 : i32
    %c0_i32_0 = arith.constant 0 : i32
    %c0_i32_1 = arith.constant 0 : i32
    return %c0_i32, %c0_i32_0 : i32, i32
  }
  func.func @transform_5(%arg0: i32) -> (i32, i32) {
    %c0_i32 = arith.constant 0 : i32
    %c0_i32_0 = arith.constant 0 : i32
    return %arg0, %c0_i32 : i32, i32
  }
}

</mosaic_0001>

<llo_original>
// kernel: classifier_spk_eresnet_abn_forward.1
$region0: #{classifier_spk_eresnet_abn_forward.1}
  #allocation0 [shape = 'u32[]', space=smem, size = 0x4, offset = 0x4, fixed_abs, tag = 'smem constant byte address 0x4 - core index']
  #allocation1 [shape = 'u32[144,128]{1,0:T(1,128)}', space=vmem, size = 0x12000, scoped, tag = 'internal scratch']
  %s0 = inlined_call_operand.vmem [shape: f32[8,192], index: 0, kind: input, shape index: {}]
  %s1 = inlined_call_operand.hbm [shape: f32[192,512], index: 1, kind: input, shape index: {}]
  %s2 = inlined_call_operand.vmem [shape: f32[512,256], index: 2, kind: input, shape index: {}]
  %s3 = inlined_call_operand.hbm [shape: f32[256,256], index: 3, kind: input, shape index: {}]
  %s4 = inlined_call_operand.vmem [shape: f32[256,128], index: 4, kind: input, shape index: {}]
  %s5 = inlined_call_operand.vmem [shape: f32[8,128], index: 5, kind: output, shape index: {}]
  %s6 = sld [smem:[#allocation0]]
  $region38: #{classifier_spk_eresnet_abn_forward.1} parent=0
    _
  %s8 = ssub.s32 1, %s6
  %s9 = scalar_select 0, %s8, %s6
  $region1: #{classifier_spk_eresnet_abn_forward.1} parent=0
    #allocation2 [shape = 'u8[393216]{0}', space=vmem, size = 0x60000, scoped, tag = 'input window, operand 1, single buffered']
    #allocation3 [shape = 's32[1]{0}', space=sflag, size = 0x4, scoped, tag = 'scoped memory for classifier_spk_eresnet_abn_forward.1']
    #allocation4 [shape = 'u8[262144]{0}', space=vmem, size = 0x40000, scoped, tag = 'input window, operand 3, single buffered']
    #allocation5 [shape = 's32[1]{0}', space=sflag, size = 0x4, scoped, tag = 'scoped memory for classifier_spk_eresnet_abn_forward.1']
    %10 = vsyncpa [#allocation3], 0
    %11 = vsyncpa [#allocation5], 0
    // Predicated region
    $region2: #{classifier_spk_eresnet_abn_forward.1} parent=1 // pred_check
      _
    $region3: #{classifier_spk_eresnet_abn_forward.1} parent=1 // pred_check_branch
      %13 = sbr.rel (0) target = $region5
    $region4: #{classifier_spk_eresnet_abn_forward.1} parent=1 // pred_region
      _
    $region5: #{classifier_spk_eresnet_abn_forward.1} parent=1 // pred_fallthru
      _
    // Predicated region
    $region6: #{classifier_spk_eresnet_abn_forward.1} parent=1 // pred_check
      _
    $region7: #{classifier_spk_eresnet_abn_forward.1} parent=1 // pred_check_branch
      %15 = sbr.rel (0) target = $region9
    $region8: #{classifier_spk_eresnet_abn_forward.1} parent=1 // pred_region
      %s17 = ssub.s32 12288, 12288
      %18 = vsyncadd [#allocation3], %s17
      %s19 = sshll.u32 [#allocation2], 4
      %s20 = int_to_ptr.vmem [resolvable:$true] %s19
      %25 = dma.hbm_to_vmem [thread:$0]  %s1, 12288, %s20, [#allocation3], 512, 512, 32
    $region9: #{classifier_spk_eresnet_abn_forward.1} parent=1 // pred_fallthru
      _
    // Predicated region
    $region10: #{classifier_spk_eresnet_abn_forward.1} parent=1 // pred_check
      _
    $region11: #{classifier_spk_eresnet_abn_forward.1} parent=1 // pred_check_branch
      %27 = sbr.rel (0) target = $region13
    $region12: #{classifier_spk_eresnet_abn_forward.1} parent=1 // pred_region
      _
    $region13: #{classifier_spk_eresnet_abn_forward.1} parent=1 // pred_fallthru
      _
    // Predicated region
    $region14: #{classifier_spk_eresnet_abn_forward.1} parent=1 // pred_check
      _
    $region15: #{classifier_spk_eresnet_abn_forward.1} parent=1 // pred_check_branch
      %29 = sbr.rel (0) target = $region17
    $region16: #{classifier_spk_eresnet_abn_forward.1} parent=1 // pred_region
      %s31 = ssub.s32 8192, 8192
      %32 = vsyncadd [#allocation5], %s31
      %s33 = sshll.u32 [#allocation4], 4
      %s34 = int_to_ptr.vmem [resolvable:$true] %s33
      %39 = dma.hbm_to_vmem [thread:$0]  %s3, 8192, %s34, [#allocation5], 256, 256, 16
    $region17: #{classifier_spk_eresnet_abn_forward.1} parent=1 // pred_fallthru
      _
    // Predicated region
    $region18: #{classifier_spk_eresnet_abn_forward.1} parent=1 // pred_check
      _
    $region19: #{classifier_spk_eresnet_abn_forward.1} parent=1 // pred_check_branch
      %41 = sbr.rel (0) target = $region21
    $region20: #{classifier_spk_eresnet_abn_forward.1} parent=1 // pred_region
      _
    $region21: #{classifier_spk_eresnet_abn_forward.1} parent=1 // pred_fallthru
      _
    // Predicated region
    $region22: #{classifier_spk_eresnet_abn_forward.1} parent=1 // pred_check
      _
    $region23: #{classifier_spk_eresnet_abn_forward.1} parent=1 // pred_check_branch
      %43 = sbr.rel (0) target = $region25
    $region24: #{classifier_spk_eresnet_abn_forward.1} parent=1 // pred_region
      %44 = dma.done [#allocation3], 12288
    $region25: #{classifier_spk_eresnet_abn_forward.1} parent=1 // pred_fallthru
      _
    // Predicated region
    $region26: #{classifier_spk_eresnet_abn_forward.1} parent=1 // pred_check
      _
    $region27: #{classifier_spk_eresnet_abn_forward.1} parent=1 // pred_check_branch
      %46 = sbr.rel (0) target = $region29
    $region28: #{classifier_spk_eresnet_abn_forward.1} parent=1 // pred_region
      %47 = dma.done [#allocation5], 8192
    $region29: #{classifier_spk_eresnet_abn_forward.1} parent=1 // pred_fallthru
      _
    %v48 = vld [vmem:[%s0] sm:$0xff]
    %v49 = vld [vmem:[%s0 + $0x8] sm:$0xff]
    %v50 = vld [vmem:[#allocation2] sm:$0xff]
    %v51 = vld [vmem:[#allocation2 + $0x8] sm:$0xff]
    %v52 = vld [vmem:[#allocation2 + $0x10] sm:$0xff]
    %v53 = vld [vmem:[#allocation2 + $0x18] sm:$0xff]
    %v54 = vld [vmem:[#allocation2 + $0x20] sm:$0xff]
    %v55 = vld [vmem:[#allocation2 + $0x28] sm:$0xff]
    %v56 = vld [vmem:[#allocation2 + $0x30] sm:$0xff]
    %v57 = vld [vmem:[#allocation2 + $0x38] sm:$0xff]
    %v58 = vld [vmem:[#allocation2 + $0x40] sm:$0xff]
    %v59 = vld [vmem:[#allocation2 + $0x48] sm:$0xff]
    %v60 = vld [vmem:[#allocation2 + $0x50] sm:$0xff]
    %v61 = vld [vmem:[#allocation2 + $0x58] sm:$0xff]
    %v62 = vld [vmem:[#allocation2 + $0x60] sm:$0xff]
    %v63 = vld [vmem:[#allocation2 + $0x68] sm:$0xff]
    %v64 = vld [vmem:[#allocation2 + $0x70] sm:$0xff]
    %v65 = vld [vmem:[#allocation2 + $0x78] sm:$0xff]
    %v66 = vld [vmem:[#allocation2 + $0x80] sm:$0xff]
    %v67 = vld [vmem:[#allocation2 + $0x88] sm:$0xff]
    %v68 = vld [vmem:[#allocation2 + $0x90] sm:$0xff]
    %v69 = vld [vmem:[#allocation2 + $0x98] sm:$0xff]
    %v70 = vld [vmem:[#allocation2 + $0xa0] sm:$0xff]
    %v71 = vld [vmem:[#allocation2 + $0xa8] sm:$0xff]
    %v72 = vld [vmem:[#allocation2 + $0xb0] sm:$0xff]
    %v73 = vld [vmem:[#allocation2 + $0xb8] sm:$0xff]
    %v74 = vld [vmem:[#allocation2 + $0xc0] sm:$0xff]
    %v75 = vld [vmem:[#allocation2 + $0xc8] sm:$0xff]
    %v76 = vld [vmem:[#allocation2 + $0xd0] sm:$0xff]
    %v77 = vld [vmem:[#allocation2 + $0xd8] sm:$0xff]
    %v78 = vld [vmem:[#allocation2 + $0xe0] sm:$0xff]
    %v79 = vld [vmem:[#allocation2 + $0xe8] sm:$0xff]
    %v80 = vld [vmem:[#allocation2 + $0xf0] sm:$0xff]
    %v81 = vld [vmem:[#allocation2 + $0xf8] sm:$0xff]
    %v82 = vld [vmem:[#allocation2 + $0x100] sm:$0xff]
    %v83 = vld [vmem:[#allocation2 + $0x108] sm:$0xff]
    %v84 = vld [vmem:[#allocation2 + $0x110] sm:$0xff]
    %v85 = vld [vmem:[#allocation2 + $0x118] sm:$0xff]
    %v86 = vld [vmem:[#allocation2 + $0x120] sm:$0xff]
    %v87 = vld [vmem:[#allocation2 + $0x128] sm:$0xff]
    %v88 = vld [vmem:[#allocation2 + $0x130] sm:$0xff]
    %v89 = vld [vmem:[#allocation2 + $0x138] sm:$0xff]
    %v90 = vld [vmem:[#allocation2 + $0x140] sm:$0xff]
    %v91 = vld [vmem:[#allocation2 + $0x148] sm:$0xff]
    %v92 = vld [vmem:[#allocation2 + $0x150] sm:$0xff]
    %v93 = vld [vmem:[#allocation2 + $0x158] sm:$0xff]
    %v94 = vld [vmem:[#allocation2 + $0x160] sm:$0xff]
    %v95 = vld [vmem:[#allocation2 + $0x168] sm:$0xff]
    %v96 = vld [vmem:[#allocation2 + $0x170] sm:$0xff]
    %v97 = vld [vmem:[#allocation2 + $0x178] sm:$0xff]
    %v98 = vld [vmem:[#allocation2 + $0x180] sm:$0xff]
    %v99 = vld [vmem:[#allocation2 + $0x188] sm:$0xff]
    %v100 = vld [vmem:[#allocation2 + $0x190] sm:$0xff]
    %v101 = vld [vmem:[#allocation2 + $0x198] sm:$0xff]
    %v102 = vld [vmem:[#allocation2 + $0x1a0] sm:$0xff]
    %v103 = vld [vmem:[#allocation2 + $0x1a8] sm:$0xff]
    %v104 = vld [vmem:[#allocation2 + $0x1b0] sm:$0xff]
    %v105 = vld [vmem:[#allocation2 + $0x1b8] sm:$0xff]
    %v106 = vld [vmem:[#allocation2 + $0x1c0] sm:$0xff]
    %v107 = vld [vmem:[#allocation2 + $0x1c8] sm:$0xff]
    %v108 = vld [vmem:[#allocation2 + $0x1d0] sm:$0xff]
    %v109 = vld [vmem:[#allocation2 + $0x1d8] sm:$0xff]
    %v110 = vld [vmem:[#allocation2 + $0x1e0] sm:$0xff]
    %v111 = vld [vmem:[#allocation2 + $0x1e8] sm:$0xff]
    %v112 = vld [vmem:[#allocation2 + $0x1f0] sm:$0xff]
    %v113 = vld [vmem:[#allocation2 + $0x1f8] sm:$0xff]
    %v114 = vld [vmem:[#allocation2 + $0x200] sm:$0xff]
    %v115 = vld [vmem:[#allocation2 + $0x208] sm:$0xff]
    %v116 = vld [vmem:[#allocation2 + $0x210] sm:$0xff]
    %v117 = vld [vmem:[#allocation2 + $0x218] sm:$0xff]
    %v118 = vld [vmem:[#allocation2 + $0x220] sm:$0xff]
    %v119 = vld [vmem:[#allocation2 + $0x228] sm:$0xff]
    %v120 = vld [vmem:[#allocation2 + $0x230] sm:$0xff]
    %v121 = vld [vmem:[#allocation2 + $0x238] sm:$0xff]
    %v122 = vld [vmem:[#allocation2 + $0x240] sm:$0xff]
    %v123 = vld [vmem:[#allocation2 + $0x248] sm:$0xff]
    %v124 = vld [vmem:[#allocation2 + $0x250] sm:$0xff]
    %v125 = vld [vmem:[#allocation2 + $0x258] sm:$0xff]
    %v126 = vld [vmem:[#allocation2 + $0x260] sm:$0xff]
    %v127 = vld [vmem:[#allocation2 + $0x268] sm:$0xff]
    %v128 = vld [vmem:[#allocation2 + $0x270] sm:$0xff]
    %v129 = vld [vmem:[#allocation2 + $0x278] sm:$0xff]
    %v130 = vld [vmem:[#allocation2 + $0x280] sm:$0xff]
    %v131 = vld [vmem:[#allocation2 + $0x288] sm:$0xff]
    %v132 = vld [vmem:[#allocation2 + $0x290] sm:$0xff]
    %v133 = vld [vmem:[#allocation2 + $0x298] sm:$0xff]
    %v134 = vld [vmem:[#allocation2 + $0x2a0] sm:$0xff]
    %v135 = vld [vmem:[#allocation2 + $0x2a8] sm:$0xff]
    %v136 = vld [vmem:[#allocation2 + $0x2b0] sm:$0xff]
    %v137 = vld [vmem:[#allocation2 + $0x2b8] sm:$0xff]
    %v138 = vld [vmem:[#allocation2 + $0x2c0] sm:$0xff]
    %v139 = vld [vmem:[#allocation2 + $0x2c8] sm:$0xff]
    %v140 = vld [vmem:[#allocation2 + $0x2d0] sm:$0xff]
    %v141 = vld [vmem:[#allocation2 + $0x2d8] sm:$0xff]
    %v142 = vld [vmem:[#allocation2 + $0x2e0] sm:$0xff]
    %v143 = vld [vmem:[#allocation2 + $0x2e8] sm:$0xff]
    %v144 = vld [vmem:[#allocation2 + $0x2f0] sm:$0xff]
    %v145 = vld [vmem:[#allocation2 + $0x2f8] sm:$0xff]
    %vm146 = vcmask 523264
    %v148 = vsel %vm146, %v49, 0
    %150 = vmatprep.subr.mxu0 %v51
    %151 = vmatpush1.msra.mxu0 %v50
    %152 = vmatprep.subr.mxu0 %v55
    %153 = vmatpush1.msra.mxu0 %v54
    %154 = vmatprep.subr.mxu0 %v59
    %155 = vmatpush1.msra.mxu0 %v58
    %156 = vmatprep.subr.mxu0 %v63
    %157 = vmatpush1.msra.mxu0 %v62
    %158 = vmatprep.subr.mxu0 %v67
    %159 = vmatpush1.msra.mxu0 %v66
    %160 = vmatprep.subr.mxu0 %v71
    %161 = vmatpush1.msra.mxu0 %v70
    %162 = vmatprep.subr.mxu0 %v75
    %163 = vmatpush1.msra.mxu0 %v74
    %164 = vmatprep.subr.mxu0 %v79
    %165 = vmatpush1.msra.mxu0 %v78
    %166 = vmatprep.subr.mxu0 %v83
    %167 = vmatpush1.msra.mxu0 %v82
    %168 = vmatprep.subr.mxu0 %v87
    %169 = vmatpush1.msra.mxu0 %v86
    %170 = vmatprep.subr.mxu0 %v91
    %171 = vmatpush1.msra.mxu0 %v90
    %172 = vmatprep.subr.mxu0 %v95
    %173 = vmatpush1.msra.mxu0 %v94
    %174 = vmatprep.subr.mxu0 %v99
    %175 = vmatpush1.msra.mxu0 %v98
    %176 = vmatprep.subr.mxu0 %v103
    %177 = vmatpush1.msra.mxu0 %v102
    %178 = vmatprep.subr.mxu0 %v107
    %179 = vmatpush1.msra.mxu0 %v106
    %180 = vmatprep.subr.mxu0 %v111
    %181 = vmatpush1.msra.mxu0 %v110
    %182 = vmatprep.subr.mxu0 %v115
    %183 = vmatpush1.msra.mxu0 %v114
    %184 = vmatprep.subr.mxu0 %v119
    %185 = vmatpush1.msra.mxu0 %v118
    %186 = vmatprep.subr.mxu0 %v123
    %187 = vmatpush1.msra.mxu0 %v122
    %188 = vmatprep.subr.mxu0 %v127
    %189 = vmatpush1.msra.mxu0 %v126
    %190 = vmatprep.subr.mxu0 %v131
    %191 = vmatpush1.msra.mxu0 %v130
    %192 = vmatprep.subr.mxu0 %v135
    %193 = vmatpush1.msra.mxu0 %v134
    %194 = vmatprep.subr.mxu0 %v139
    %195 = vmatpush1.msra.mxu0 %v138
    %196 = vmatprep.subr.mxu0 %v143
    %197 = vmatpush1.msra.mxu0 %v142
    %198 = vmatprep.subr.mxu0 0.0
    %199 = vmatpush1.msra.mxu0 0.0
    %200 = vmatprep.subr.mxu0 0.0
    %201 = vmatpush1.msra.mxu0 0.0
    %202 = vmatprep.subr.mxu0 0.0
    %203 = vmatpush1.msra.mxu0 0.0
    %204 = vmatprep.subr.mxu0 0.0
    %205 = vmatpush1.msra.mxu0 0.0
    %206 = vmatprep.subr.mxu0 0.0
    %207 = vmatpush1.msra.mxu0 0.0
    %208 = vmatprep.subr.mxu0 0.0
    %209 = vmatpush1.msra.mxu0 0.0
    %210 = vmatprep.subr.mxu0 0.0
    %211 = vmatpush1.msra.mxu0 0.0
    %212 = vmatprep.subr.mxu0 0.0
    %213 = vmatpush1.msra.mxu0 0.0
    %214 = vmatprep.mubr.f32.mxu0 %v148
    %215 = vmatmul.mubr.f32.gmra.mrb[0].mxu0 %v48
    %v216 = vpop.f32.mrb[0].mxu0
    %v217 = vadd.f32 0.0, %v216
    %v218 = vpop.f32.mrb[0].mxu0
    %v219 = vadd.f32 0.0, %v218
    %220 = vdwg.mxu0
    %221 = vmatprep.subr.mxu0 %v53
    %222 = vmatpush1.msra.mxu0 %v52
    %223 = vmatprep.subr.mxu0 %v57
    %224 = vmatpush1.msra.mxu0 %v56
    %225 = vmatprep.subr.mxu0 %v61
    %226 = vmatpush1.msra.mxu0 %v60
    %227 = vmatprep.subr.mxu0 %v65
    %228 = vmatpush1.msra.mxu0 %v64
    %229 = vmatprep.subr.mxu0 %v69
    %230 = vmatpush1.msra.mxu0 %v68
    %231 = vmatprep.subr.mxu0 %v73
    %232 = vmatpush1.msra.mxu0 %v72
    %233 = vmatprep.subr.mxu0 %v77
    %234 = vmatpush1.msra.mxu0 %v76
    %235 = vmatprep.subr.mxu0 %v81
    %236 = vmatpush1.msra.mxu0 %v80
    %237 = vmatprep.subr.mxu0 %v85
    %238 = vmatpush1.msra.mxu0 %v84
    %239 = vmatprep.subr.mxu0 %v89
    %240 = vmatpush1.msra.mxu0 %v88
    %241 = vmatprep.subr.mxu0 %v93
    %242 = vmatpush1.msra.mxu0 %v92
    %243 = vmatprep.subr.mxu0 %v97
    %244 = vmatpush1.msra.mxu0 %v96
    %245 = vmatprep.subr.mxu0 %v101
    %246 = vmatpush1.msra.mxu0 %v100
    %247 = vmatprep.subr.mxu0 %v105
    %248 = vmatpush1.msra.mxu0 %v104
    %249 = vmatprep.subr.mxu0 %v109
    %250 = vmatpush1.msra.mxu0 %v108
    %251 = vmatprep.subr.mxu0 %v113
    %252 = vmatpush1.msra.mxu0 %v112
    %253 = vmatprep.subr.mxu0 %v117
    %254 = vmatpush1.msra.mxu0 %v116
    %255 = vmatprep.subr.mxu0 %v121
    %256 = vmatpush1.msra.mxu0 %v120
    %257 = vmatprep.subr.mxu0 %v125
    %258 = vmatpush1.msra.mxu0 %v124
    %259 = vmatprep.subr.mxu0 %v129
    %260 = vmatpush1.msra.mxu0 %v128
    %261 = vmatprep.subr.mxu0 %v133
    %262 = vmatpush1.msra.mxu0 %v132
    %263 = vmatprep.subr.mxu0 %v137
    %264 = vmatpush1.msra.mxu0 %v136
    %265 = vmatprep.subr.mxu0 %v141
    %266 = vmatpush1.msra.mxu0 %v140
    %267 = vmatprep.subr.mxu0 %v145
    %268 = vmatpush1.msra.mxu0 %v144
    %269 = vmatprep.subr.mxu0 0.0
    %270 = vmatpush1.msra.mxu0 0.0
    %271 = vmatprep.subr.mxu0 0.0
    %272 = vmatpush1.msra.mxu0 0.0
    %273 = vmatprep.subr.mxu0 0.0
    %274 = vmatpush1.msra.mxu0 0.0
    %275 = vmatprep.subr.mxu0 0.0
    %276 = vmatpush1.msra.mxu0 0.0
    %277 = vmatprep.subr.mxu0 0.0
    %278 = vmatpush1.msra.mxu0 0.0
    %279 = vmatprep.subr.mxu0 0.0
    %280 = vmatpush1.msra.mxu0 0.0
    %281 = vmatprep.subr.mxu0 0.0
    %282 = vmatpush1.msra.mxu0 0.0
    %283 = vmatprep.subr.mxu0 0.0
    %284 = vmatpush1.msra.mxu0 0.0
    %285 = vmatprep.mubr.f32.mxu0 %v148
    %286 = vmatmul.mubr.f32.gmra.mrb[0].mxu0 %v48
    %v287 = vpop.f32.mrb[0].mxu0
    %v288 = vadd.f32 0.0, %v287
    %v289 = vpop.f32.mrb[0].mxu0
    %v290 = vadd.f32 0.0, %v289
    %291 = vdwg.mxu0
    %v292 = vadd.f32 %v217, %v219
    %v293 = vadd.f32 %v292, %v288
    %v294 = vadd.f32 %v293, %v290
    %295 = vadd.xlane.f32.xlu0 %v294
    %v296 = vpop.xlane.xlu0 %295
    %v297 = vmul.f32 %v296, 0.001953125
    %v298 = vmul.f32 %v217, %v217
    %v299 = vmul.f32 %v219, %v219
    %v300 = vmul.f32 %v288, %v288
    %v301 = vmul.f32 %v290, %v290
    %v302 = vadd.f32 %v298, %v299
    %v303 = vadd.f32 %v302, %v300
    %v304 = vadd.f32 %v303, %v301
    %305 = vadd.xlane.f32.xlu0 %v304
    %v306 = vpop.xlane.xlu0 %305
    %v307 = vmul.f32 %v306, 0.001953125
    %v308 = vmul.f32 %v297, %v297
    %v309 = vsub.f32 %v307, %v308
    %v310 = vmax.f32 %v309, 0.0
    %v311 = vsub.f32 %v217, %v297
    %v312 = vsub.f32 %v219, %v297
    %v313 = vsub.f32 %v288, %v297
    %v314 = vsub.f32 %v290, %v297
    %v315 = vadd.f32 %v310, 1e-05
    %v316 = vrsqrt.pop %v315
    %v317 = vmul.f32 %v311, %v316
    %v318 = vmul.f32 %v312, %v316
    %v319 = vmul.f32 %v313, %v316
    %v320 = vmul.f32 %v314, %v316
    %v321 = vmax.f32 %v317, 0.0
    %v322 = vmax.f32 %v318, 0.0
    %v323 = vmax.f32 %v319, 0.0
    %v324 = vmax.f32 %v320, 0.0
    %v325 = vld [vmem:[%s2] sm:$0xff]
    %v326 = vld [vmem:[%s2 + $0x8] sm:$0xff]
    %v327 = vld [vmem:[%s2 + $0x10] sm:$0xff]
    %v328 = vld [vmem:[%s2 + $0x18] sm:$0xff]
    %v329 = vld [vmem:[%s2 + $0x20] sm:$0xff]
    %v330 = vld [vmem:[%s2 + $0x28] sm:$0xff]
    %v331 = vld [vmem:[%s2 + $0x30] sm:$0xff]
    %v332 = vld [vmem:[%s2 + $0x38] sm:$0xff]
    %v333 = vld [vmem:[%s2 + $0x40] sm:$0xff]
    %v334 = vld [vmem:[%s2 + $0x48] sm:$0xff]
    %v335 = vld [vmem:[%s2 + $0x50] sm:$0xff]
    %v336 = vld [vmem:[%s2 + $0x58] sm:$0xff]
    %v337 = vld [vmem:[%s2 + $0x60] sm:$0xff]
    %v338 = vld [vmem:[%s2 + $0x68] sm:$0xff]
    %v339 = vld [vmem:[%s2 + $0x70] sm:$0xff]
    %v340 = vld [vmem:[%s2 + $0x78] sm:$0xff]
    %v341 = vld [vmem:[%s2 + $0x80] sm:$0xff]
    %v342 = vld [vmem:[%s2 + $0x88] sm:$0xff]
    %v343 = vld [vmem:[%s2 + $0x90] sm:$0xff]
    %v344 = vld [vmem:[%s2 + $0x98] sm:$0xff]
    %v345 = vld [vmem:[%s2 + $0xa0] sm:$0xff]
    %v346 = vld [vmem:[%s2 + $0xa8] sm:$0xff]
    %v347 = vld [vmem:[%s2 + $0xb0] sm:$0xff]
    %v348 = vld [vmem:[%s2 + $0xb8] sm:$0xff]
    %v349 = vld [vmem:[%s2 + $0xc0] sm:$0xff]
    %v350 = vld [vmem:[%s2 + $0xc8] sm:$0xff]
    %v351 = vld [vmem:[%s2 + $0xd0] sm:$0xff]
    %v352 = vld [vmem:[%s2 + $0xd8] sm:$0xff]
    %v353 = vld [vmem:[%s2 + $0xe0] sm:$0xff]
    %v354 = vld [vmem:[%s2 + $0xe8] sm:$0xff]
    %v355 = vld [vmem:[%s2 + $0xf0] sm:$0xff]
    %v356 = vld [vmem:[%s2 + $0xf8] sm:$0xff]
    %v357 = vld [vmem:[%s2 + $0x100] sm:$0xff]
    %v358 = vld [vmem:[%s2 + $0x108] sm:$0xff]
    %v359 = vld [vmem:[%s2 + $0x110] sm:$0xff]
    %v360 = vld [vmem:[%s2 + $0x118] sm:$0xff]
    %v361 = vld [vmem:[%s2 + $0x120] sm:$0xff]
    %v362 = vld [vmem:[%s2 + $0x128] sm:$0xff]
    %v363 = vld [vmem:[%s2 + $0x130] sm:$0xff]
    %v364 = vld [vmem:[%s2 + $0x138] sm:$0xff]
    %v365 = vld [vmem:[%s2 + $0x140] sm:$0xff]
    %v366 = vld [vmem:[%s2 + $0x148] sm:$0xff]
    %v367 = vld [vmem:[%s2 + $0x150] sm:$0xff]
    %v368 = vld [vmem:[%s2 + $0x158] sm:$0xff]
    %v369 = vld [vmem:[%s2 + $0x160] sm:$0xff]
    %v370 = vld [vmem:[%s2 + $0x168] sm:$0xff]
    %v371 = vld [vmem:[%s2 + $0x170] sm:$0xff]
    %v372 = vld [vmem:[%s2 + $0x178] sm:$0xff]
    %v373 = vld [vmem:[%s2 + $0x180] sm:$0xff]
    %v374 = vld [vmem:[%s2 + $0x188] sm:$0xff]
    %v375 = vld [vmem:[%s2 + $0x190] sm:$0xff]
    %v376 = vld [vmem:[%s2 + $0x198] sm:$0xff]
    %v377 = vld [vmem:[%s2 + $0x1a0] sm:$0xff]
    %v378 = vld [vmem:[%s2 + $0x1a8] sm:$0xff]
    %v379 = vld [vmem:[%s2 + $0x1b0] sm:$0xff]
    %v380 = vld [vmem:[%s2 + $0x1b8] sm:$0xff]
    %v381 = vld [vmem:[%s2 + $0x1c0] sm:$0xff]
    %v382 = vld [vmem:[%s2 + $0x1c8] sm:$0xff]
    %v383 = vld [vmem:[%s2 + $0x1d0] sm:$0xff]
    %v384 = vld [vmem:[%s2 + $0x1d8] sm:$0xff]
    %v385 = vld [vmem:[%s2 + $0x1e0] sm:$0xff]
    %v386 = vld [vmem:[%s2 + $0x1e8] sm:$0xff]
    %v387 = vld [vmem:[%s2 + $0x1f0] sm:$0xff]
    %v388 = vld [vmem:[%s2 + $0x1f8] sm:$0xff]
    %v389 = vld [vmem:[%s2 + $0x200] sm:$0xff]
    %v390 = vld [vmem:[%s2 + $0x208] sm:$0xff]
    %v391 = vld [vmem:[%s2 + $0x210] sm:$0xff]
    %v392 = vld [vmem:[%s2 + $0x218] sm:$0xff]
    %v393 = vld [vmem:[%s2 + $0x220] sm:$0xff]
    %v394 = vld [vmem:[%s2 + $0x228] sm:$0xff]
    %v395 = vld [vmem:[%s2 + $0x230] sm:$0xff]
    %v396 = vld [vmem:[%s2 + $0x238] sm:$0xff]
    %v397 = vld [vmem:[%s2 + $0x240] sm:$0xff]
    %v398 = vld [vmem:[%s2 + $0x248] sm:$0xff]
    %v399 = vld [vmem:[%s2 + $0x250] sm:$0xff]
    %v400 = vld [vmem:[%s2 + $0x258] sm:$0xff]
    %v401 = vld [vmem:[%s2 + $0x260] sm:$0xff]
    %v402 = vld [vmem:[%s2 + $0x268] sm:$0xff]
    %v403 = vld [vmem:[%s2 + $0x270] sm:$0xff]
    %v404 = vld [vmem:[%s2 + $0x278] sm:$0xff]
    %v405 = vld [vmem:[%s2 + $0x280] sm:$0xff]
    %v406 = vld [vmem:[%s2 + $0x288] sm:$0xff]
    %v407 = vld [vmem:[%s2 + $0x290] sm:$0xff]
    %v408 = vld [vmem:[%s2 + $0x298] sm:$0xff]
    %v409 = vld [vmem:[%s2 + $0x2a0] sm:$0xff]
    %v410 = vld [vmem:[%s2 + $0x2a8] sm:$0xff]
    %v411 = vld [vmem:[%s2 + $0x2b0] sm:$0xff]
    %v412 = vld [vmem:[%s2 + $0x2b8] sm:$0xff]
    %v413 = vld [vmem:[%s2 + $0x2c0] sm:$0xff]
    %v414 = vld [vmem:[%s2 + $0x2c8] sm:$0xff]
    %v415 = vld [vmem:[%s2 + $0x2d0] sm:$0xff]
    %v416 = vld [vmem:[%s2 + $0x2d8] sm:$0xff]
    %v417 = vld [vmem:[%s2 + $0x2e0] sm:$0xff]
    %v418 = vld [vmem:[%s2 + $0x2e8] sm:$0xff]
    %v419 = vld [vmem:[%s2 + $0x2f0] sm:$0xff]
    %v420 = vld [vmem:[%s2 + $0x2f8] sm:$0xff]
    %v421 = vld [vmem:[%s2 + $0x300] sm:$0xff]
    %v422 = vld [vmem:[%s2 + $0x308] sm:$0xff]
    %v423 = vld [vmem:[%s2 + $0x310] sm:$0xff]
    %v424 = vld [vmem:[%s2 + $0x318] sm:$0xff]
    %v425 = vld [vmem:[%s2 + $0x320] sm:$0xff]
    %v426 = vld [vmem:[%s2 + $0x328] sm:$0xff]
    %v427 = vld [vmem:[%s2 + $0x330] sm:$0xff]
    %v428 = vld [vmem:[%s2 + $0x338] sm:$0xff]
    %v429 = vld [vmem:[%s2 + $0x340] sm:$0xff]
    %v430 = vld [vmem:[%s2 + $0x348] sm:$0xff]
    %v431 = vld [vmem:[%s2 + $0x350] sm:$0xff]
    %v432 = vld [vmem:[%s2 + $0x358] sm:$0xff]
    %v433 = vld [vmem:[%s2 + $0x360] sm:$0xff]
    %v434 = vld [vmem:[%s2 + $0x368] sm:$0xff]
    %v435 = vld [vmem:[%s2 + $0x370] sm:$0xff]
    %v436 = vld [vmem:[%s2 + $0x378] sm:$0xff]
    %v437 = vld [vmem:[%s2 + $0x380] sm:$0xff]
    %v438 = vld [vmem:[%s2 + $0x388] sm:$0xff]
    %v439 = vld [vmem:[%s2 + $0x390] sm:$0xff]
    %v440 = vld [vmem:[%s2 + $0x398] sm:$0xff]
    %v441 = vld [vmem:[%s2 + $0x3a0] sm:$0xff]
    %v442 = vld [vmem:[%s2 + $0x3a8] sm:$0xff]
    %v443 = vld [vmem:[%s2 + $0x3b0] sm:$0xff]
    %v444 = vld [vmem:[%s2 + $0x3b8] sm:$0xff]
    %v445 = vld [vmem:[%s2 + $0x3c0] sm:$0xff]
    %v446 = vld [vmem:[%s2 + $0x3c8] sm:$0xff]
    %v447 = vld [vmem:[%s2 + $0x3d0] sm:$0xff]
    %v448 = vld [vmem:[%s2 + $0x3d8] sm:$0xff]
    %v449 = vld [vmem:[%s2 + $0x3e0] sm:$0xff]
    %v450 = vld [vmem:[%s2 + $0x3e8] sm:$0xff]
    %v451 = vld [vmem:[%s2 + $0x3f0] sm:$0xff]
    %v452 = vld [vmem:[%s2 + $0x3f8] sm:$0xff]
    %453 = vmatprep.subr.mxu0 %v326
    %454 = vmatpush1.msra.mxu0 %v325
    %455 = vmatprep.subr.mxu0 %v328
    %456 = vmatpush1.msra.mxu0 %v327
    %457 = vmatprep.subr.mxu0 %v330
    %458 = vmatpush1.msra.mxu0 %v329
    %459 = vmatprep.subr.mxu0 %v332
    %460 = vmatpush1.msra.mxu0 %v331
    %461 = vmatprep.subr.mxu0 %v334
    %462 = vmatpush1.msra.mxu0 %v333
    %463 = vmatprep.subr.mxu0 %v336
    %464 = vmatpush1.msra.mxu0 %v335
    %465 = vmatprep.subr.mxu0 %v338
    %466 = vmatpush1.msra.mxu0 %v337
    %467 = vmatprep.subr.mxu0 %v340
    %468 = vmatpush1.msra.mxu0 %v339
    %469 = vmatprep.subr.mxu0 %v342
    %470 = vmatpush1.msra.mxu0 %v341
    %471 = vmatprep.subr.mxu0 %v344
    %472 = vmatpush1.msra.mxu0 %v343
    %473 = vmatprep.subr.mxu0 %v346
    %474 = vmatpush1.msra.mxu0 %v345
    %475 = vmatprep.subr.mxu0 %v348
    %476 = vmatpush1.msra.mxu0 %v347
    %477 = vmatprep.subr.mxu0 %v350
    %478 = vmatpush1.msra.mxu0 %v349
    %479 = vmatprep.subr.mxu0 %v352
    %480 = vmatpush1.msra.mxu0 %v351
    %481 = vmatprep.subr.mxu0 %v354
    %482 = vmatpush1.msra.mxu0 %v353
    %483 = vmatprep.subr.mxu0 %v356
    %484 = vmatpush1.msra.mxu0 %v355
    %485 = vmatprep.subr.mxu0 %v358
    %486 = vmatpush1.msra.mxu0 %v357
    %487 = vmatprep.subr.mxu0 %v360
    %488 = vmatpush1.msra.mxu0 %v359
    %489 = vmatprep.subr.mxu0 %v362
    %490 = vmatpush1.msra.mxu0 %v361
    %491 = vmatprep.subr.mxu0 %v364
    %492 = vmatpush1.msra.mxu0 %v363
    %493 = vmatprep.subr.mxu0 %v366
    %494 = vmatpush1.msra.mxu0 %v365
    %495 = vmatprep.subr.mxu0 %v368
    %496 = vmatpush1.msra.mxu0 %v367
    %497 = vmatprep.subr.mxu0 %v370
    %498 = vmatpush1.msra.mxu0 %v369
    %499 = vmatprep.subr.mxu0 %v372
    %500 = vmatpush1.msra.mxu0 %v371
    %501 = vmatprep.subr.mxu0 %v374
    %502 = vmatpush1.msra.mxu0 %v373
    %503 = vmatprep.subr.mxu0 %v376
    %504 = vmatpush1.msra.mxu0 %v375
    %505 = vmatprep.subr.mxu0 %v378
    %506 = vmatpush1.msra.mxu0 %v377
    %507 = vmatprep.subr.mxu0 %v380
    %508 = vmatpush1.msra.mxu0 %v379
    %509 = vmatprep.subr.mxu0 %v382
    %510 = vmatpush1.msra.mxu0 %v381
    %511 = vmatprep.subr.mxu0 %v384
    %512 = vmatpush1.msra.mxu0 %v383
    %513 = vmatprep.subr.mxu0 %v386
    %514 = vmatpush1.msra.mxu0 %v385
    %515 = vmatprep.subr.mxu0 %v388
    %516 = vmatpush1.msra.mxu0 %v387
    %517 = vmatprep.mubr.f32.mxu0 %v322
    %518 = vmatmul.mubr.f32.gmra.mrb[0].mxu0 %v321
    %v519 = vpop.f32.mrb[0].mxu0
    %v520 = vadd.f32 0.0, %v519
    %v521 = vpop.f32.mrb[0].mxu0
    %v522 = vadd.f32 0.0, %v521
    %523 = vdwg.mxu0
    %524 = vmatprep.subr.mxu0 %v390
    %525 = vmatpush1.msra.mxu0 %v389
    %526 = vmatprep.subr.mxu0 %v392
    %527 = vmatpush1.msra.mxu0 %v391
    %528 = vmatprep.subr.mxu0 %v394
    %529 = vmatpush1.msra.mxu0 %v393
    %530 = vmatprep.subr.mxu0 %v396
    %531 = vmatpush1.msra.mxu0 %v395
    %532 = vmatprep.subr.mxu0 %v398
    %533 = vmatpush1.msra.mxu0 %v397
    %534 = vmatprep.subr.mxu0 %v400
    %535 = vmatpush1.msra.mxu0 %v399
    %536 = vmatprep.subr.mxu0 %v402
    %537 = vmatpush1.msra.mxu0 %v401
    %538 = vmatprep.subr.mxu0 %v404
    %539 = vmatpush1.msra.mxu0 %v403
    %540 = vmatprep.subr.mxu0 %v406
    %541 = vmatpush1.msra.mxu0 %v405
    %542 = vmatprep.subr.mxu0 %v408
    %543 = vmatpush1.msra.mxu0 %v407
    %544 = vmatprep.subr.mxu0 %v410
    %545 = vmatpush1.msra.mxu0 %v409
    %546 = vmatprep.subr.mxu0 %v412
    %547 = vmatpush1.msra.mxu0 %v411
    %548 = vmatprep.subr.mxu0 %v414
    %549 = vmatpush1.msra.mxu0 %v413
    %550 = vmatprep.subr.mxu0 %v416
    %551 = vmatpush1.msra.mxu0 %v415
    %552 = vmatprep.subr.mxu0 %v418
    %553 = vmatpush1.msra.mxu0 %v417
    %554 = vmatprep.subr.mxu0 %v420
    %555 = vmatpush1.msra.mxu0 %v419
    %556 = vmatprep.subr.mxu0 %v422
    %557 = vmatpush1.msra.mxu0 %v421
    %558 = vmatprep.subr.mxu0 %v424
    %559 = vmatpush1.msra.mxu0 %v423
    %560 = vmatprep.subr.mxu0 %v426
    %561 = vmatpush1.msra.mxu0 %v425
    %562 = vmatprep.subr.mxu0 %v428
    %563 = vmatpush1.msra.mxu0 %v427
    %564 = vmatprep.subr.mxu0 %v430
    %565 = vmatpush1.msra.mxu0 %v429
    %566 = vmatprep.subr.mxu0 %v432
    %567 = vmatpush1.msra.mxu0 %v431
    %568 = vmatprep.subr.mxu0 %v434
    %569 = vmatpush1.msra.mxu0 %v433
    %570 = vmatprep.subr.mxu0 %v436
    %571 = vmatpush1.msra.mxu0 %v435
    %572 = vmatprep.subr.mxu0 %v438
    %573 = vmatpush1.msra.mxu0 %v437
    %574 = vmatprep.subr.mxu0 %v440
    %575 = vmatpush1.msra.mxu0 %v439
    %576 = vmatprep.subr.mxu0 %v442
    %577 = vmatpush1.msra.mxu0 %v441
    %578 = vmatprep.subr.mxu0 %v444
    %579 = vmatpush1.msra.mxu0 %v443
    %580 = vmatprep.subr.mxu0 %v446
    %581 = vmatpush1.msra.mxu0 %v445
    %582 = vmatprep.subr.mxu0 %v448
    %583 = vmatpush1.msra.mxu0 %v447
    %584 = vmatprep.subr.mxu0 %v450
    %585 = vmatpush1.msra.mxu0 %v449
    %586 = vmatprep.subr.mxu0 %v452
    %587 = vmatpush1.msra.mxu0 %v451
    %588 = vmatprep.mubr.f32.mxu0 %v324
    %589 = vmatmul.mubr.f32.gmra.mrb[0].mxu0 %v323
    %v590 = vpop.f32.mrb[0].mxu0
    %v591 = vadd.f32 %v520, %v590
    %v592 = vpop.f32.mrb[0].mxu0
    %v593 = vadd.f32 %v522, %v592
    %594 = vdwg.mxu0
    %v595 = vadd.f32 %v591, %v593
    %596 = vadd.xlane.f32.xlu0 %v595
    %v597 = vpop.xlane.xlu0 %596
    %v598 = vmul.f32 %v597, 0.00390625
    %v599 = vmul.f32 %v591, %v591
    %v600 = vmul.f32 %v593, %v593
    %v601 = vadd.f32 %v599, %v600
    %602 = vadd.xlane.f32.xlu0 %v601
    %v603 = vpop.xlane.xlu0 %602
    %v604 = vmul.f32 %v603, 0.00390625
    %v605 = vmul.f32 %v598, %v598
    %v606 = vsub.f32 %v604, %v605
    %v607 = vmax.f32 %v606, 0.0
    %v608 = vsub.f32 %v591, %v598
    %v609 = vsub.f32 %v593, %v598
    %v610 = vadd.f32 %v607, 1e-05
    %v611 = vrsqrt.pop %v610
    %v612 = vmul.f32 %v608, %v611
    %v613 = vmul.f32 %v609, %v611
    %v614 = vmax.f32 %v612, 0.0
    %v615 = vmax.f32 %v613, 0.0
    %v616 = vld [vmem:[#allocation4] sm:$0xff]
    %v617 = vld [vmem:[#allocation4 + $0x8] sm:$0xff]
    %v618 = vld [vmem:[#allocation4 + $0x10] sm:$0xff]
    %v619 = vld [vmem:[#allocation4 + $0x18] sm:$0xff]
    %v620 = vld [vmem:[#allocation4 + $0x20] sm:$0xff]
    %v621 = vld [vmem:[#allocation4 + $0x28] sm:$0xff]
    %v622 = vld [vmem:[#allocation4 + $0x30] sm:$0xff]
    %v623 = vld [vmem:[#allocation4 + $0x38] sm:$0xff]
    %v624 = vld [vmem:[#allocation4 + $0x40] sm:$0xff]
    %v625 = vld [vmem:[#allocation4 + $0x48] sm:$0xff]
    %v626 = vld [vmem:[#allocation4 + $0x50] sm:$0xff]
    %v627 = vld [vmem:[#allocation4 + $0x58] sm:$0xff]
    %v628 = vld [vmem:[#allocation4 + $0x60] sm:$0xff]
    %v629 = vld [vmem:[#allocation4 + $0x68] sm:$0xff]
    %v630 = vld [vmem:[#allocation4 + $0x70] sm:$0xff]
    %v631 = vld [vmem:[#allocation4 + $0x78] sm:$0xff]
    %v632 = vld [vmem:[#allocation4 + $0x80] sm:$0xff]
    %v633 = vld [vmem:[#allocation4 + $0x88] sm:$0xff]
    %v634 = vld [vmem:[#allocation4 + $0x90] sm:$0xff]
    %v635 = vld [vmem:[#allocation4 + $0x98] sm:$0xff]
    %v636 = vld [vmem:[#allocation4 + $0xa0] sm:$0xff]
    %v637 = vld [vmem:[#allocation4 + $0xa8] sm:$0xff]
    %v638 = vld [vmem:[#allocation4 + $0xb0] sm:$0xff]
    %v639 = vld [vmem:[#allocation4 + $0xb8] sm:$0xff]
    %v640 = vld [vmem:[#allocation4 + $0xc0] sm:$0xff]
    %v641 = vld [vmem:[#allocation4 + $0xc8] sm:$0xff]
    %v642 = vld [vmem:[#allocation4 + $0xd0] sm:$0xff]
    %v643 = vld [vmem:[#allocation4 + $0xd8] sm:$0xff]
    %v644 = vld [vmem:[#allocation4 + $0xe0] sm:$0xff]
    %v645 = vld [vmem:[#allocation4 + $0xe8] sm:$0xff]
    %v646 = vld [vmem:[#allocation4 + $0xf0] sm:$0xff]
    %v647 = vld [vmem:[#allocation4 + $0xf8] sm:$0xff]
    %v648 = vld [vmem:[#allocation4 + $0x100] sm:$0xff]
    %v649 = vld [vmem:[#allocation4 + $0x108] sm:$0xff]
    %v650 = vld [vmem:[#allocation4 + $0x110] sm:$0xff]
    %v651 = vld [vmem:[#allocation4 + $0x118] sm:$0xff]
    %v652 = vld [vmem:[#allocation4 + $0x120] sm:$0xff]
    %v653 = vld [vmem:[#allocation4 + $0x128] sm:$0xff]
    %v654 = vld [vmem:[#allocation4 + $0x130] sm:$0xff]
    %v655 = vld [vmem:[#allocation4 + $0x138] sm:$0xff]
    %v656 = vld [vmem:[#allocation4 + $0x140] sm:$0xff]
    %v657 = vld [vmem:[#allocation4 + $0x148] sm:$0xff]
    %v658 = vld [vmem:[#allocation4 + $0x150] sm:$0xff]
    %v659 = vld [vmem:[#allocation4 + $0x158] sm:$0xff]
    %v660 = vld [vmem:[#allocation4 + $0x160] sm:$0xff]
    %v661 = vld [vmem:[#allocation4 + $0x168] sm:$0xff]
    %v662 = vld [vmem:[#allocation4 + $0x170] sm:$0xff]
    %v663 = vld [vmem:[#allocation4 + $0x178] sm:$0xff]
    %v664 = vld [vmem:[#allocation4 + $0x180] sm:$0xff]
    %v665 = vld [vmem:[#allocation4 + $0x188] sm:$0xff]
    %v666 = vld [vmem:[#allocation4 + $0x190] sm:$0xff]
    %v667 = vld [vmem:[#allocation4 + $0x198] sm:$0xff]
    %v668 = vld [vmem:[#allocation4 + $0x1a0] sm:$0xff]
    %v669 = vld [vmem:[#allocation4 + $0x1a8] sm:$0xff]
    %v670 = vld [vmem:[#allocation4 + $0x1b0] sm:$0xff]
    %v671 = vld [vmem:[#allocation4 + $0x1b8] sm:$0xff]
    %v672 = vld [vmem:[#allocation4 + $0x1c0] sm:$0xff]
    %v673 = vld [vmem:[#allocation4 + $0x1c8] sm:$0xff]
    %v674 = vld [vmem:[#allocation4 + $0x1d0] sm:$0xff]
    %v675 = vld [vmem:[#allocation4 + $0x1d8] sm:$0xff]
    %v676 = vld [vmem:[#allocation4 + $0x1e0] sm:$0xff]
    %v677 = vld [vmem:[#allocation4 + $0x1e8] sm:$0xff]
    %v678 = vld [vmem:[#allocation4 + $0x1f0] sm:$0xff]
    %v679 = vld [vmem:[#allocation4 + $0x1f8] sm:$0xff]
    %680 = vmatprep.subr.mxu0 %v617
    %681 = vmatpush1.msra.mxu0 %v616
    %682 = vmatprep.subr.mxu0 %v619
    %683 = vmatpush1.msra.mxu0 %v618
    %684 = vmatprep.subr.mxu0 %v621
    %685 = vmatpush1.msra.mxu0 %v620
    %686 = vmatprep.subr.mxu0 %v623
    %687 = vmatpush1.msra.mxu0 %v622
    %688 = vmatprep.subr.mxu0 %v625
    %689 = vmatpush1.msra.mxu0 %v624
    %690 = vmatprep.subr.mxu0 %v627
    %691 = vmatpush1.msra.mxu0 %v626
    %692 = vmatprep.subr.mxu0 %v629
    %693 = vmatpush1.msra.mxu0 %v628
    %694 = vmatprep.subr.mxu0 %v631
    %695 = vmatpush1.msra.mxu0 %v630
    %696 = vmatprep.subr.mxu0 %v633
    %697 = vmatpush1.msra.mxu0 %v632
    %698 = vmatprep.subr.mxu0 %v635
    %699 = vmatpush1.msra.mxu0 %v634
    %700 = vmatprep.subr.mxu0 %v637
    %701 = vmatpush1.msra.mxu0 %v636
    %702 = vmatprep.subr.mxu0 %v639
    %703 = vmatpush1.msra.mxu0 %v638
    %704 = vmatprep.subr.mxu0 %v641
    %705 = vmatpush1.msra.mxu0 %v640
    %706 = vmatprep.subr.mxu0 %v643
    %707 = vmatpush1.msra.mxu0 %v642
    %708 = vmatprep.subr.mxu0 %v645
    %709 = vmatpush1.msra.mxu0 %v644
    %710 = vmatprep.subr.mxu0 %v647
    %711 = vmatpush1.msra.mxu0 %v646
    %712 = vmatprep.subr.mxu0 %v649
    %713 = vmatpush1.msra.mxu0 %v648
    %714 = vmatprep.subr.mxu0 %v651
    %715 = vmatpush1.msra.mxu0 %v650
    %716 = vmatprep.subr.mxu0 %v653
    %717 = vmatpush1.msra.mxu0 %v652
    %718 = vmatprep.subr.mxu0 %v655
    %719 = vmatpush1.msra.mxu0 %v654
    %720 = vmatprep.subr.mxu0 %v657
    %721 = vmatpush1.msra.mxu0 %v656
    %722 = vmatprep.subr.mxu0 %v659
    %723 = vmatpush1.msra.mxu0 %v658
    %724 = vmatprep.subr.mxu0 %v661
    %725 = vmatpush1.msra.mxu0 %v660
    %726 = vmatprep.subr.mxu0 %v663
    %727 = vmatpush1.msra.mxu0 %v662
    %728 = vmatprep.subr.mxu0 %v665
    %729 = vmatpush1.msra.mxu0 %v664
    %730 = vmatprep.subr.mxu0 %v667
    %731 = vmatpush1.msra.mxu0 %v666
    %732 = vmatprep.subr.mxu0 %v669
    %733 = vmatpush1.msra.mxu0 %v668
    %734 = vmatprep.subr.mxu0 %v671
    %735 = vmatpush1.msra.mxu0 %v670
    %736 = vmatprep.subr.mxu0 %v673
    %737 = vmatpush1.msra.mxu0 %v672
    %738 = vmatprep.subr.mxu0 %v675
    %739 = vmatpush1.msra.mxu0 %v674
    %740 = vmatprep.subr.mxu0 %v677
    %741 = vmatpush1.msra.mxu0 %v676
    %742 = vmatprep.subr.mxu0 %v679
    %743 = vmatpush1.msra.mxu0 %v678
    %744 = vmatprep.mubr.f32.mxu0 %v615
    %745 = vmatmul.mubr.f32.gmra.mrb[0].mxu0 %v614
    %v746 = vpop.f32.mrb[0].mxu0
    %v747 = vadd.f32 0.0, %v746
    %v748 = vpop.f32.mrb[0].mxu0
    %v749 = vadd.f32 0.0, %v748
    %750 = vdwg.mxu0
    %v751 = vadd.f32 %v747, %v749
    %752 = vadd.xlane.f32.xlu0 %v751
    %v753 = vpop.xlane.xlu0 %752
    %v754 = vmul.f32 %v753, 0.00390625
    %v755 = vmul.f32 %v747, %v747
    %v756 = vmul.f32 %v749, %v749
    %v757 = vadd.f32 %v755, %v756
    %758 = vadd.xlane.f32.xlu0 %v757
    %v759 = vpop.xlane.xlu0 %758
    %v760 = vmul.f32 %v759, 0.00390625
    %v761 = vmul.f32 %v754, %v754
    %v762 = vsub.f32 %v760, %v761
    %v763 = vmax.f32 %v762, 0.0
    %v764 = vsub.f32 %v747, %v754
    %v765 = vsub.f32 %v749, %v754
    %v766 = vadd.f32 %v763, 1e-05
    %v767 = vrsqrt.pop %v766
    %v768 = vmul.f32 %v764, %v767
    %v769 = vmul.f32 %v765, %v767
    %v770 = vmax.f32 %v768, 0.0
    %v771 = vmax.f32 %v769, 0.0
    %v772 = vld [vmem:[%s4] sm:$0xff]
    %v773 = vld [vmem:[%s4 + $0x8] sm:$0xff]
    %v774 = vld [vmem:[%s4 + $0x10] sm:$0xff]
    %v775 = vld [vmem:[%s4 + $0x18] sm:$0xff]
    %v776 = vld [vmem:[%s4 + $0x20] sm:$0xff]
    %v777 = vld [vmem:[%s4 + $0x28] sm:$0xff]
    %v778 = vld [vmem:[%s4 + $0x30] sm:$0xff]
    %v779 = vld [vmem:[%s4 + $0x38] sm:$0xff]
    %v780 = vld [vmem:[%s4 + $0x40] sm:$0xff]
    %v781 = vld [vmem:[%s4 + $0x48] sm:$0xff]
    %v782 = vld [vmem:[%s4 + $0x50] sm:$0xff]
    %v783 = vld [vmem:[%s4 + $0x58] sm:$0xff]
    %v784 = vld [vmem:[%s4 + $0x60] sm:$0xff]
    %v785 = vld [vmem:[%s4 + $0x68] sm:$0xff]
    %v786 = vld [vmem:[%s4 + $0x70] sm:$0xff]
    %v787 = vld [vmem:[%s4 + $0x78] sm:$0xff]
    %v788 = vld [vmem:[%s4 + $0x80] sm:$0xff]
    %v789 = vld [vmem:[%s4 + $0x88] sm:$0xff]
    %v790 = vld [vmem:[%s4 + $0x90] sm:$0xff]
    %v791 = vld [vmem:[%s4 + $0x98] sm:$0xff]
    %v792 = vld [vmem:[%s4 + $0xa0] sm:$0xff]
    %v793 = vld [vmem:[%s4 + $0xa8] sm:$0xff]
    %v794 = vld [vmem:[%s4 + $0xb0] sm:$0xff]
    %v795 = vld [vmem:[%s4 + $0xb8] sm:$0xff]
    %v796 = vld [vmem:[%s4 + $0xc0] sm:$0xff]
    %v797 = vld [vmem:[%s4 + $0xc8] sm:$0xff]
    %v798 = vld [vmem:[%s4 + $0xd0] sm:$0xff]
    %v799 = vld [vmem:[%s4 + $0xd8] sm:$0xff]
    %v800 = vld [vmem:[%s4 + $0xe0] sm:$0xff]
    %v801 = vld [vmem:[%s4 + $0xe8] sm:$0xff]
    %v802 = vld [vmem:[%s4 + $0xf0] sm:$0xff]
    %v803 = vld [vmem:[%s4 + $0xf8] sm:$0xff]
    %804 = vmatprep.subr.mxu0 0.0
    %805 = vmatpush1.msra.mxu0 %v772
    %806 = vmatprep.subr.mxu0 0.0
    %807 = vmatpush1.msra.mxu0 %v773
    %808 = vmatprep.subr.mxu0 0.0
    %809 = vmatpush1.msra.mxu0 %v774
    %810 = vmatprep.subr.mxu0 0.0
    %811 = vmatpush1.msra.mxu0 %v775
    %812 = vmatprep.subr.mxu0 0.0
    %813 = vmatpush1.msra.mxu0 %v776
    %814 = vmatprep.subr.mxu0 0.0
    %815 = vmatpush1.msra.mxu0 %v777
    %816 = vmatprep.subr.mxu0 0.0
    %817 = vmatpush1.msra.mxu0 %v778
    %818 = vmatprep.subr.mxu0 0.0
    %819 = vmatpush1.msra.mxu0 %v779
    %820 = vmatprep.subr.mxu0 0.0
    %821 = vmatpush1.msra.mxu0 %v780
    %822 = vmatprep.subr.mxu0 0.0
    %823 = vmatpush1.msra.mxu0 %v781
    %824 = vmatprep.subr.mxu0 0.0
    %825 = vmatpush1.msra.mxu0 %v782
    %826 = vmatprep.subr.mxu0 0.0
    %827 = vmatpush1.msra.mxu0 %v783
    %828 = vmatprep.subr.mxu0 0.0
    %829 = vmatpush1.msra.mxu0 %v784
    %830 = vmatprep.subr.mxu0 0.0
    %831 = vmatpush1.msra.mxu0 %v785
    %832 = vmatprep.subr.mxu0 0.0
    %833 = vmatpush1.msra.mxu0 %v786
    %834 = vmatprep.subr.mxu0 0.0
    %835 = vmatpush1.msra.mxu0 %v787
    %836 = vmatprep.subr.mxu0 0.0
    %837 = vmatpush1.msra.mxu0 %v788
    %838 = vmatprep.subr.mxu0 0.0
    %839 = vmatpush1.msra.mxu0 %v789
    %840 = vmatprep.subr.mxu0 0.0
    %841 = vmatpush1.msra.mxu0 %v790
    %842 = vmatprep.subr.mxu0 0.0
    %843 = vmatpush1.msra.mxu0 %v791
    %844 = vmatprep.subr.mxu0 0.0
    %845 = vmatpush1.msra.mxu0 %v792
    %846 = vmatprep.subr.mxu0 0.0
    %847 = vmatpush1.msra.mxu0 %v793
    %848 = vmatprep.subr.mxu0 0.0
    %849 = vmatpush1.msra.mxu0 %v794
    %850 = vmatprep.subr.mxu0 0.0
    %851 = vmatpush1.msra.mxu0 %v795
    %852 = vmatprep.subr.mxu0 0.0
    %853 = vmatpush1.msra.mxu0 %v796
    %854 = vmatprep.subr.mxu0 0.0
    %855 = vmatpush1.msra.mxu0 %v797
    %856 = vmatprep.subr.mxu0 0.0
    %857 = vmatpush1.msra.mxu0 %v798
    %858 = vmatprep.subr.mxu0 0.0
    %859 = vmatpush1.msra.mxu0 %v799
    %860 = vmatprep.subr.mxu0 0.0
    %861 = vmatpush1.msra.mxu0 %v800
    %862 = vmatprep.subr.mxu0 0.0
    %863 = vmatpush1.msra.mxu0 %v801
    %864 = vmatprep.subr.mxu0 0.0
    %865 = vmatpush1.msra.mxu0 %v802
    %866 = vmatprep.subr.mxu0 0.0
    %867 = vmatpush1.msra.mxu0 %v803
    %868 = vmatprep.mubr.f32.mxu0 %v771
    %869 = vmatmul.mubr.f32.gmra.mrb[0].mxu0 %v770
    %v870 = vpop.f32.mrb[0].mxu0
    %v871 = vadd.f32 0.0, %v870
    %v872 = vpop.f32.mrb[0].mxu0
    %873 = vdwg.mxu0
    %874 = vst [vmem:[%s5] sm:$0xff] %v871
    // Predicated region
    $region30: #{classifier_spk_eresnet_abn_forward.1} parent=1 // pred_check
      _
    $region31: #{classifier_spk_eresnet_abn_forward.1} parent=1 // pred_check_branch
      %876 = sbr.rel (0) target = $region33
    $region32: #{classifier_spk_eresnet_abn_forward.1} parent=1 // pred_region
      _
    $region33: #{classifier_spk_eresnet_abn_forward.1} parent=1 // pred_fallthru
      _
    // Predicated region
    $region34: #{classifier_spk_eresnet_abn_forward.1} parent=1 // pred_check
      _
    $region35: #{classifier_spk_eresnet_abn_forward.1} parent=1 // pred_check_branch
      %878 = sbr.rel (0) target = $region37
    $region36: #{classifier_spk_eresnet_abn_forward.1} parent=1 // pred_region
      _
    $region37: #{classifier_spk_eresnet_abn_forward.1} parent=1 // pred_fallthru
      _
    %879 = vsyncpa [#allocation3], 1
    %880 = vsyncpa [#allocation5], 1

</llo_original>
